<compile_context>
chip_gen: v7x
topology: tpu7x:2x2x1
jax: 0.10.0
libtpu: 0.0.40
codegen_flags: <defaults>
</compile_context>

<pallas_src>
import jax
import jax.numpy as jnp
from jax.experimental import pallas as pl
from jax.experimental.pallas import tpu as pltpu

_LANES = 128          # vreg lane width
_SUBLANES = 8         # f32 vreg sublane count
_TILE_ROWS = 2048     # 2048 * 128 * 4 B = 1 MiB per f32 block (x + out, double-buffered -> ~4 MiB)
_PALLAS_MIN_ELEMS = 8 * 1024   # below this, a fused XLA mul-add beats kernel launch overhead


def _affine_kernel(wb_ref, x_ref, o_ref):
    """y = x * w + b, broadcast scale-and-shift over a lane-dense tile.

    wb_ref : (2,) f32 in SMEM, packed (w, b).
    x_ref / o_ref : (TILE_ROWS, 128) tile in VMEM.
    """
    w = wb_ref[0]
    b = wb_ref[1]
    o_ref[...] = (x_ref[...].astype(jnp.float32) * w + b).astype(o_ref.dtype)


def linear_block_pallas(x, w, b, *, tile_rows=_TILE_ROWS):
    """Apply LinearBlock(1, 1): x:[N,1] @ w.T:[1,1] + b:[1] -> [N,1]."""
    n, f = x.shape
    assert f == 1, "dummy LinearBlock has in_features == 1"
    out_dtype = x.dtype

    w_s = jnp.asarray(w, jnp.float32).reshape(())
    b_s = jnp.asarray(b, jnp.float32).reshape(())

    # Tiny inputs: per-grid-step overhead (~0.35 us) plus the pallas_call
    # custom-call boundary dominate; let XLA fuse the multiply-add instead.
    if n < _PALLAS_MIN_ELEMS:
        return (x.astype(jnp.float32) * w_s + b_s).astype(out_dtype)

    # Lane-dense layout: pad N up to a multiple of 8*128 and view as
    # [rows, 128]; rows is then a multiple of 8 so the (tile_rows, 128)
    # block satisfies the (8, 128) tiling constraint.
    chunk = _SUBLANES * _LANES
    padded = pl.cdiv(n, chunk) * chunk
    x_flat = jnp.pad(x.reshape(-1), (0, padded - n))
    rows = padded // _LANES
    x2d = x_flat.reshape(rows, _LANES)

    # If the whole thing is smaller than one tile, use the full extent
    # (block == full array dim is always legal, any dtype).
    tr = min(tile_rows, rows)
    grid = (pl.cdiv(rows, tr),)

    wb = jnp.stack([w_s, b_s])  # packed (2,) scalar operand for SMEM

    y2d = pl.pallas_call(
        _affine_kernel,
        out_shape=jax.ShapeDtypeStruct((rows, _LANES), out_dtype),
        grid=grid,
        in_specs=[
            pl.BlockSpec(memory_space=pltpu.MemorySpace.SMEM),   # packed (w, b)
            pl.BlockSpec((tr, _LANES), lambda i: (i, 0)),        # x tile
        ],
        out_specs=pl.BlockSpec((tr, _LANES), lambda i: (i, 0)),
        compiler_params=pltpu.CompilerParams(
            dimension_semantics=("parallel",),   # v7x: shard tiles across both TCs
        ),
    )(wb, x2d)

    # Strip the padded tail and restore the [N, 1] activation layout.
    return y2d.reshape(-1)[:n].reshape(n, 1)


class Generator:
    """JAX/Pallas port of the dummy imaginaire Generator."""

    def __init__(self, gen_cfg=None, data_cfg=None):
        # Deterministic init of the unused dummy_layer = LinearBlock(1, 1).
        key = jax.random.PRNGKey(0)
        kw, kb = jax.random.split(key)
        # nn.Linear-style uniform(-1/sqrt(fan_in), 1/sqrt(fan_in)) with fan_in=1.
        self.dummy_w = jax.random.uniform(kw, (1, 1), jnp.float32, -1.0, 1.0)
        self.dummy_b = jax.random.uniform(kb, (1,), jnp.float32, -1.0, 1.0)

    def dummy_layer(self, x):
        """The LinearBlock(1, 1) compute path (Pallas above the size threshold)."""
        return linear_block_pallas(x, self.dummy_w, self.dummy_b)

    def forward(self, data):
        """Dummy Generator forward: matches PyTorch semantics exactly."""
        # TODO(synk): the reference forward performs no computation and
        # returns None; the dummy_layer kernel is exposed separately above.
        return None

    __call__ = forward


if __name__ == "__main__":
    gen = Generator(gen_cfg=None, data_cfg=None)
    key = jax.random.PRNGKey(0)
    k1, k2 = jax.random.split(key)

    # Forward pass on a small "data" dict: must return None, like the reference.
    x_small = jax.random.normal(k1, (8, 1), jnp.float32)   # [N=8, F=1]
    data = {"images": x_small}
    out = gen(data)
    assert out is None

    # 1) Small path (N=8): bypasses Pallas, plain fused XLA mul-add.
    y_small = jax.block_until_ready(gen.dummy_layer(x_small))
    ref_small = x_small @ gen.dummy_w.T + gen.dummy_b
    assert jnp.allclose(y_small, ref_small, atol=1e-6), "small-path mismatch"

    # 2) Pallas path: N chosen above the threshold and deliberately not a
    #    multiple of 1024 to exercise the lane-dense padding + tail slice.
    n_big = 9000
    x_big = jax.random.normal(k2, (n_big, 1), jnp.float32)
    y_big = jax.block_until_ready(gen.dummy_layer(x_big))
    ref_big = x_big @ gen.dummy_w.T + gen.dummy_b
    assert y_big.shape == (n_big, 1)
    assert jnp.allclose(y_big, ref_big, atol=1e-6), "Pallas LinearBlock mismatch"

    print("KERNEL_OK")
</pallas_src>

<mosaic_0001>
module attributes {stable_mosaic.version = 11 : i64} {
  func.func @_affine_kernel(%arg0: i32, %arg1: memref<2xf32, #tpu.memory_space<smem>>, %arg2: memref<72x128xf32, #tpu.memory_space<vmem>>, %arg3: memref<72x128xf32, #tpu.memory_space<vmem>>) attributes {dimension_semantics = [#tpu.dimension_semantics<parallel>], iteration_bounds = array<i64: 1>, scalar_prefetch = 0 : i64, scratch_operands = 0 : i64, tpu.core_type = #tpu.core_type<tc>, window_params = [{transform_indices = @transform_0, window_bounds = array<i64: 2>}, {transform_indices = @transform_1, window_bounds = array<i64: 72, 128>}, {transform_indices = @transform_2, window_bounds = array<i64: 72, 128>}]} {
    %c0 = arith.constant 0 : index
    %0 = memref.load %arg1[%c0] : memref<2xf32, #tpu.memory_space<smem>>
    %c1 = arith.constant 1 : index
    %1 = memref.load %arg1[%c1] : memref<2xf32, #tpu.memory_space<smem>>
    %c0_0 = arith.constant 0 : index
    %c0_1 = arith.constant 0 : index
    %2 = vector.load %arg2[%c0_0, %c0_1] : memref<72x128xf32, #tpu.memory_space<vmem>>, vector<72x128xf32>
    %3 = vector.broadcast %0 : f32 to vector<72x128xf32>
    %4 = arith.mulf %2, %3 : vector<72x128xf32>
    %5 = vector.broadcast %1 : f32 to vector<72x128xf32>
    %6 = arith.addf %4, %5 : vector<72x128xf32>
    %c0_2 = arith.constant 0 : index
    %c0_3 = arith.constant 0 : index
    %7 = vector.load %arg3[%c0_2, %c0_3] : memref<72x128xf32, #tpu.memory_space<vmem>>, vector<72x128xf32>
    tpu.vector_store %arg3[%c0_2, %c0_3], %6 {strides = array<i32>} : memref<72x128xf32, #tpu.memory_space<vmem>>, vector<72x128xf32>,
    return
  }
  func.func @transform_0(%arg0: i32) -> i32 {
    %c0_i32 = arith.constant 0 : i32
    %c0_i32_0 = arith.constant 0 : i32
    return %c0_i32 : i32
  }
  func.func @transform_1(%arg0: i32) -> (i32, i32) {
    %c0_i32 = arith.constant 0 : i32
    %c0_i32_0 = arith.constant 0 : i32
    return %arg0, %c0_i32 : i32, i32
  }
  func.func @transform_2(%arg0: i32) -> (i32, i32) {
    %c0_i32 = arith.constant 0 : i32
    %c0_i32_0 = arith.constant 0 : i32
    return %arg0, %c0_i32 : i32, i32
  }
}

</mosaic_0001>

<llo_original>
// kernel: tpu_custom_call.1
$region0: #{tpu_custom_call.1}
  #allocation0 [shape = 'u32[]', space=smem, size = 0x4, offset = 0x4, fixed_abs, tag = 'smem constant byte address 0x4 - core index']
  #allocation1 [shape = 'u32[144,128]{1,0:T(1,128)}', space=vmem, size = 0x12000, scoped, tag = 'internal scratch']
  %s0 = inlined_call_operand.hbm [shape: f32[2], index: 0, kind: input, shape index: {}]
  %s1 = inlined_call_operand.hbm [shape: f32[72,128], index: 1, kind: input, shape index: {}]
  %s2 = inlined_call_operand.hbm [shape: f32[72,128], index: 2, kind: output, shape index: {}]
  %s3 = sld [smem:[#allocation0]]
  $region26: #{tpu_custom_call.1} parent=0
    _
  %s5 = ssub.s32 1, %s3
  %s6 = scalar_select 0, %s5, %s3
  $region1: #{tpu_custom_call.1} parent=0
    #allocation2 [shape = 'u8[512]{0}', space=smem, size = 0x200, scoped, tag = 'input window, operand 0, single buffered']
    #allocation3 [shape = 's32[1]{0}', space=sflag, size = 0x4, scoped, tag = 'scoped memory for tpu_custom_call.1']
    #allocation4 [shape = 's32[1]{0}', space=sflag, size = 0x4, scoped, tag = 'scoped memory for tpu_custom_call.1']
    #allocation5 [shape = 's32[1]{0}', space=sflag, size = 0x4, scoped, tag = 'scoped memory for tpu_custom_call.1']
    #allocation6 [shape = 'u8[36864]{0}', space=vmem, size = 0x9000, scoped, tag = 'input window, operand 1, single buffered']
    #allocation7 [shape = 'u8[36864]{0}', space=vmem, size = 0x9000, scoped, tag = 'output window, operand 0, single buffered']
    %7 = vsyncpa [#allocation5], 0
    %8 = vsyncpa [#allocation3], 0
    %9 = vsyncpa [#allocation4], 0
    // Predicated region
    $region2: #{tpu_custom_call.1} parent=1 // pred_check
      _
    $region3: #{tpu_custom_call.1} parent=1 // pred_check_branch
      %11 = sbr.rel (0) target = $region5
    $region4: #{tpu_custom_call.1} parent=1 // pred_region
      %s13 = ssub.s32 16, 16
      %14 = vsyncadd [#allocation5], %s13
      %17 = dma.hbm_to_smem %s0, 16, [#allocation2], [#allocation5]
    $region5: #{tpu_custom_call.1} parent=1 // pred_fallthru
      _
    // Predicated region
    $region6: #{tpu_custom_call.1} parent=1 // pred_check
      _
    $region7: #{tpu_custom_call.1} parent=1 // pred_check_branch
      %19 = sbr.rel (0) target = $region9
    $region8: #{tpu_custom_call.1} parent=1 // pred_region
      %s21 = ssub.s32 1152, 1152
      %22 = vsyncadd [#allocation3], %s21
      %s23 = sshll.u32 [#allocation6], 4
      %s24 = int_to_ptr.vmem [resolvable:$true] %s23
      %29 = dma.hbm_to_vmem [thread:$0]  %s1, 1152, %s24, [#allocation3], 128, 128, 8
    $region9: #{tpu_custom_call.1} parent=1 // pred_fallthru
      _
    // Predicated region
    $region10: #{tpu_custom_call.1} parent=1 // pred_check
      _
    $region11: #{tpu_custom_call.1} parent=1 // pred_check_branch
      %31 = sbr.rel (0) target = $region13
    $region12: #{tpu_custom_call.1} parent=1 // pred_region
      %32 = dma.done [#allocation5], 16
    $region13: #{tpu_custom_call.1} parent=1 // pred_fallthru
      _
    // Predicated region
    $region14: #{tpu_custom_call.1} parent=1 // pred_check
      _
    $region15: #{tpu_custom_call.1} parent=1 // pred_check_branch
      %34 = sbr.rel (0) target = $region17
    $region16: #{tpu_custom_call.1} parent=1 // pred_region
      %35 = dma.done [#allocation3], 1152
    $region17: #{tpu_custom_call.1} parent=1 // pred_fallthru
      _
    %36 = sfence
    %s37 = sld [smem:[#allocation2]]
    %s38 = sld [smem:[#allocation2 + $0x1]]
    %v39 = vld [vmem:[#allocation6] sm:$0xff]
    %v40 = vld [vmem:[#allocation6 + $0x8] sm:$0xff]
    %v41 = vld [vmem:[#allocation6 + $0x10] sm:$0xff]
    %v42 = vld [vmem:[#allocation6 + $0x18] sm:$0xff]
    %v43 = vld [vmem:[#allocation6 + $0x20] sm:$0xff]
    %v44 = vld [vmem:[#allocation6 + $0x28] sm:$0xff]
    %v45 = vld [vmem:[#allocation6 + $0x30] sm:$0xff]
    %v46 = vld [vmem:[#allocation6 + $0x38] sm:$0xff]
    %v47 = vld [vmem:[#allocation6 + $0x40] sm:$0xff]
    %v48 = vstv %s37
    %v49 = vmul.f32 %v39, %v48
    %v50 = vmul.f32 %v40, %v48
    %v51 = vmul.f32 %v41, %v48
    %v52 = vmul.f32 %v42, %v48
    %v53 = vmul.f32 %v43, %v48
    %v54 = vmul.f32 %v44, %v48
    %v55 = vmul.f32 %v45, %v48
    %v56 = vmul.f32 %v46, %v48
    %v57 = vmul.f32 %v47, %v48
    %v58 = vstv %s38
    %v59 = vadd.f32 %v49, %v58
    %v60 = vadd.f32 %v50, %v58
    %v61 = vadd.f32 %v51, %v58
    %v62 = vadd.f32 %v52, %v58
    %v63 = vadd.f32 %v53, %v58
    %v64 = vadd.f32 %v54, %v58
    %v65 = vadd.f32 %v55, %v58
    %v66 = vadd.f32 %v56, %v58
    %v67 = vadd.f32 %v57, %v58
    %68 = vst [vmem:[#allocation7] sm:$0xff] %v59
    %69 = vst [vmem:[#allocation7 + $0x8] sm:$0xff] %v60
    %70 = vst [vmem:[#allocation7 + $0x10] sm:$0xff] %v61
    %71 = vst [vmem:[#allocation7 + $0x18] sm:$0xff] %v62
    %72 = vst [vmem:[#allocation7 + $0x20] sm:$0xff] %v63
    %73 = vst [vmem:[#allocation7 + $0x28] sm:$0xff] %v64
    %74 = vst [vmem:[#allocation7 + $0x30] sm:$0xff] %v65
    %75 = vst [vmem:[#allocation7 + $0x38] sm:$0xff] %v66
    %76 = vst [vmem:[#allocation7 + $0x40] sm:$0xff] %v67
    // Predicated region
    $region18: #{tpu_custom_call.1} parent=1 // pred_check
      _
    $region19: #{tpu_custom_call.1} parent=1 // pred_check_branch
      %78 = sbr.rel (0) target = $region21
    $region20: #{tpu_custom_call.1} parent=1 // pred_region
      %s80 = ssub.s32 1152, 1152
      %81 = vsyncadd [#allocation4], %s80
      %s82 = sshll.u32 [#allocation7], 4
      %s83 = int_to_ptr.vmem [resolvable:$true] %s82
      %88 = dma.vmem_to_hbm [thread:$0]  %s83, 1152, %s2, [#allocation4], 128, 128, 8
    $region21: #{tpu_custom_call.1} parent=1 // pred_fallthru
      _
    // Predicated region
    $region22: #{tpu_custom_call.1} parent=1 // pred_check
      _
    $region23: #{tpu_custom_call.1} parent=1 // pred_check_branch
      %90 = sbr.rel (0) target = $region25
    $region24: #{tpu_custom_call.1} parent=1 // pred_region
      %91 = dma.done [#allocation4], 1152
    $region25: #{tpu_custom_call.1} parent=1 // pred_fallthru
      _
    %92 = vsyncpa [#allocation3], 1
    %93 = vsyncpa [#allocation4], 1
    %94 = vsyncpa [#allocation5], 1

</llo_original>
